<compile_context>
chip_gen: v7x
topology: tpu7x:2x2x1
jax: 0.10.0
libtpu: 0.0.40
codegen_flags: <defaults>
</compile_context>

<pallas_src>
import jax
import jax.numpy as jnp
from jax.experimental import pallas as pl
from jax.experimental.pallas import tpu as pltpu


MAX_TILE_B = 2048  # power-of-two multiple of 256; fits comfortably in 32 MiB scoped VMEM


def _round_up(n, m):
    return ((n + m - 1) // m) * m


def _pick_tiling(batch):
    """Pick (tile_b, padded_b).  Static Python math (shapes are static under jit)."""
    if batch <= 256:
        tile_b = _round_up(max(batch, 1), 8)
    else:
        padded256 = _round_up(batch, 256)
        tile_b = min(MAX_TILE_B, padded256)
        if padded256 // tile_b < 2 and padded256 >= 512:
            # Keep at least 2 grid steps so v7x's 2 TensorCores both get work.
            tile_b = _round_up(padded256 // 2, 256)
    padded_b = _round_up(batch, tile_b)
    return tile_b, padded_b


def _mlp_kernel(x_ref, w1_ref, b1_ref, w2_ref, b2_ref, w3_ref, b3_ref, o_ref):
    # x tile: (TILE_B, in_dim) f32.  w2/w3 (and w1 when in_dim > 8) arrive pre-cast to bf16.
    x = x_ref[...]
    in_dim = x.shape[1]

    # ---- Layer 1 (in_dim -> width) ----
    if in_dim <= 8:
        # Tiny K: the MXU would pad K up to 128/256 and run ~1-2% efficient.
        # Do it on the VPU as a few broadcast FMAs instead (f32 throughout).
        w1 = w1_ref[...]
        h1 = x[:, 0:1] * w1[0:1, :] + b1_ref[...]
        for i in range(1, in_dim):
            h1 = h1 + x[:, i : i + 1] * w1[i : i + 1, :]
    else:
        h1 = (
            jnp.dot(
                x.astype(jnp.bfloat16),
                w1_ref[...],
                preferred_element_type=jnp.float32,
            )
            + b1_ref[...]
        )
    h1 = jnp.maximum(h1, 0.0)

    # ---- Layer 2 (width -> width): MXU matmul, bf16 operands, f32 accumulation ----
    h2 = (
        jnp.dot(h1.astype(jnp.bfloat16), w2_ref[...], preferred_element_type=jnp.float32)
        + b2_ref[...]
    )
    h2 = jnp.maximum(h2, 0.0)

    # ---- Layer 3 (width -> out_dim) + sigmoid; narrow store (out_dim lanes only) ----
    out = (
        jnp.dot(h2.astype(jnp.bfloat16), w3_ref[...], preferred_element_type=jnp.float32)
        + b3_ref[...]
    )
    o_ref[...] = jax.nn.sigmoid(out).astype(o_ref.dtype)


def prepare_mlp_params(params):
    """One-time parameter prep, hoisted out of the per-call path.

    Returns (w1, b1, w2, b2, w3, b3) with (in, out) weight layout, bf16 MXU operands
    (w1 kept f32 when the VPU small-K path will be used), and (1, n) biases in f32.
    """
    (w1, b1), (w2, b2), (w3, b3) = params
    in_dim = w1.shape[0]
    w1p = w1.astype(jnp.float32) if in_dim <= 8 else w1.astype(jnp.bfloat16)
    return (
        w1p,
        b1.reshape(1, -1).astype(jnp.float32),
        w2.astype(jnp.bfloat16),
        b2.reshape(1, -1).astype(jnp.float32),
        w3.astype(jnp.bfloat16),
        b3.reshape(1, -1).astype(jnp.float32),
    )


@jax.jit
def mlp_forward(x, w1, b1, w2, b2, w3, b3):
    batch, in_dim = x.shape
    out_dim = w3.shape[1]

    tile_b, padded_b = _pick_tiling(batch)
    if padded_b != batch:
        x = jnp.zeros((padded_b, in_dim), x.dtype).at[:batch].set(x)
    grid = (padded_b // tile_b,)

    # Weights/biases: constant block index -> stay resident in VMEM across batch tiles.
    resident = lambda a: pl.BlockSpec(a.shape, lambda i: (0,) * a.ndim)

    out = pl.pallas_call(
        _mlp_kernel,
        out_shape=jax.ShapeDtypeStruct((padded_b, out_dim), jnp.float32),
        grid=grid,
        in_specs=[
            pl.BlockSpec((tile_b, in_dim), lambda i: (i, 0)),
            resident(w1),
            resident(b1),
            resident(w2),
            resident(b2),
            resident(w3),
            resident(b3),
        ],
        out_specs=pl.BlockSpec((tile_b, out_dim), lambda i: (i, 0)),
        compiler_params=pltpu.CompilerParams(
            dimension_semantics=("parallel",),
            vmem_limit_bytes=32 * 1024 * 1024,
        ),
    )(x, w1, b1, w2, b2, w3, b3)

    if padded_b != batch:
        out = out[:batch]
    return out


def init_mlp_params(key, input_dim=2, output_dim=3, width=256, num_layers=2):
    """Deterministic init matching PyTorch nn.Linear default: U(-1/sqrt(fan_in), 1/sqrt(fan_in))."""
    dims = [input_dim] + [width] * num_layers + [output_dim]
    params = []
    for i in range(len(dims) - 1):
        fan_in, fan_out = dims[i], dims[i + 1]
        key, kw, kb = jax.random.split(key, 3)
        bound = 1.0 / (fan_in ** 0.5)
        # Stored as (in, out) so the kernel computes x @ W + b (== PyTorch x @ W.T + b).
        w = jax.random.uniform(kw, (fan_in, fan_out), jnp.float32, -bound, bound)
        b = jax.random.uniform(kb, (1, fan_out), jnp.float32, -bound, bound)
        params.append((w, b))
    return params


def mlp_reference(x, params):
    h = x
    for i, (w, b) in enumerate(params):
        h = h @ w + b
        if i < len(params) - 1:
            h = jnp.maximum(h, 0.0)
    return jax.nn.sigmoid(h)


if __name__ == "__main__":
    key = jax.random.PRNGKey(0)
    key, kx = jax.random.split(key)

    batch, input_dim, output_dim, width = 8, 2, 3, 256
    x = jax.random.normal(kx, (batch, input_dim), jnp.float32)

    params = init_mlp_params(key, input_dim, output_dim, width, num_layers=2)
    prepped = prepare_mlp_params(params)

    out = mlp_forward(x, *prepped)
    out = jax.block_until_ready(out)
    ref = mlp_reference(x, params)
    assert out.shape == (batch, output_dim), out.shape
    # bf16 matmul operands (f32 accumulation) => small drift vs the pure-f32 reference.
    assert jnp.allclose(out, ref, atol=1e-2, rtol=1e-2), (out, ref)

    # Exercise the multi-tile / padded-batch path (grid of 2 steps, batch padded to 512).
    key, kx2 = jax.random.split(key)
    x2 = jax.random.normal(kx2, (300, input_dim), jnp.float32)
    out2 = jax.block_until_ready(mlp_forward(x2, *prepped))
    ref2 = mlp_reference(x2, params)
    assert out2.shape == (300, output_dim), out2.shape
    assert jnp.allclose(out2, ref2, atol=1e-2, rtol=1e-2)

    print("KERNEL_OK")
</pallas_src>

<mosaic_0001>
module attributes {stable_mosaic.version = 11 : i64} {
  func.func @_mlp_kernel(%arg0: i32, %arg1: memref<8x2xf32, #tpu.memory_space<vmem>>, %arg2: memref<2x256xf32, #tpu.memory_space<vmem>>, %arg3: memref<1x256xf32, #tpu.memory_space<vmem>>, %arg4: memref<256x256xbf16, #tpu.memory_space<vmem>>, %arg5: memref<1x256xf32, #tpu.memory_space<vmem>>, %arg6: memref<256x3xbf16, #tpu.memory_space<vmem>>, %arg7: memref<1x3xf32, #tpu.memory_space<vmem>>, %arg8: memref<8x3xf32, #tpu.memory_space<vmem>>) attributes {dimension_semantics = [#tpu.dimension_semantics<parallel>], iteration_bounds = array<i64: 1>, scalar_prefetch = 0 : i64, scratch_operands = 0 : i64, tpu.core_type = #tpu.core_type<tc>, window_params = [{transform_indices = @transform_0, window_bounds = array<i64: 8, 2>}, {pipeline_mode = #tpu.pipeline_mode<synchronous>, transform_indices = @transform_1, window_bounds = array<i64: 2, 256>}, {pipeline_mode = #tpu.pipeline_mode<synchronous>, transform_indices = @transform_2, window_bounds = array<i64: 1, 256>}, {pipeline_mode = #tpu.pipeline_mode<synchronous>, transform_indices = @transform_3, window_bounds = array<i64: 256, 256>}, {pipeline_mode = #tpu.pipeline_mode<synchronous>, transform_indices = @transform_4, window_bounds = array<i64: 1, 256>}, {pipeline_mode = #tpu.pipeline_mode<synchronous>, transform_indices = @transform_5, window_bounds = array<i64: 256, 3>}, {pipeline_mode = #tpu.pipeline_mode<synchronous>, transform_indices = @transform_6, window_bounds = array<i64: 1, 3>}, {transform_indices = @transform_7, window_bounds = array<i64: 8, 3>}]} {
    %c0 = arith.constant 0 : index
    %c0_0 = arith.constant 0 : index
    %0 = vector.load %arg1[%c0, %c0_0] : memref<8x2xf32, #tpu.memory_space<vmem>>, vector<8x2xf32>
    %c0_1 = arith.constant 0 : index
    %c0_2 = arith.constant 0 : index
    %1 = vector.load %arg2[%c0_1, %c0_2] : memref<2x256xf32, #tpu.memory_space<vmem>>, vector<2x256xf32>
    %2 = vector.extract_strided_slice %0 {offsets = [0, 0], sizes = [8, 1], strides = [1, 1]} : vector<8x2xf32> to vector<8x1xf32>
    %3 = vector.extract_strided_slice %1 {offsets = [0, 0], sizes = [1, 256], strides = [1, 1]} : vector<2x256xf32> to vector<1x256xf32>
    %4 = vector.broadcast %2 : vector<8x1xf32> to vector<8x256xf32>
    %5 = vector.broadcast %3 : vector<1x256xf32> to vector<8x256xf32>
    %6 = arith.mulf %4, %5 : vector<8x256xf32>
    %c0_3 = arith.constant 0 : index
    %c0_4 = arith.constant 0 : index
    %7 = vector.load %arg3[%c0_3, %c0_4] : memref<1x256xf32, #tpu.memory_space<vmem>>, vector<1x256xf32>
    %8 = vector.broadcast %7 : vector<1x256xf32> to vector<8x256xf32>
    %9 = arith.addf %6, %8 : vector<8x256xf32>
    %10 = vector.extract_strided_slice %0 {offsets = [0, 1], sizes = [8, 1], strides = [1, 1]} : vector<8x2xf32> to vector<8x1xf32>
    %11 = vector.extract_strided_slice %1 {offsets = [1, 0], sizes = [1, 256], strides = [1, 1]} : vector<2x256xf32> to vector<1x256xf32>
    %12 = vector.broadcast %10 : vector<8x1xf32> to vector<8x256xf32>
    %13 = vector.broadcast %11 : vector<1x256xf32> to vector<8x256xf32>
    %14 = arith.mulf %12, %13 : vector<8x256xf32>
    %15 = arith.addf %9, %14 : vector<8x256xf32>
    %cst = arith.constant 0.000000e+00 : f32
    %16 = vector.broadcast %cst : f32 to vector<8x256xf32>
    %17 = arith.maximumf %15, %16 : vector<8x256xf32>
    %18 = arith.truncf %17 : vector<8x256xf32> to vector<8x256xbf16>
    %c0_5 = arith.constant 0 : index
    %c0_6 = arith.constant 0 : index
    %19 = vector.load %arg4[%c0_5, %c0_6] : memref<256x256xbf16, #tpu.memory_space<vmem>>, vector<256x256xbf16>
    %cst_7 = arith.constant dense<0.000000e+00> : vector<8x256xf32>
    %20 = tpu.matmul %18, %19, %cst_7 {dimension_numbers = #tpu.dot_dimension_numbers<[1], [0], [0], [1], [0, 0, 1, 1], [], []>} : vector<8x256xbf16>, vector<256x256xbf16>, vector<8x256xf32> -> vector<8x256xf32>
    %c0_8 = arith.constant 0 : index
    %c0_9 = arith.constant 0 : index
    %21 = vector.load %arg5[%c0_8, %c0_9] : memref<1x256xf32, #tpu.memory_space<vmem>>, vector<1x256xf32>
    %22 = vector.broadcast %21 : vector<1x256xf32> to vector<8x256xf32>
    %23 = arith.addf %20, %22 : vector<8x256xf32>
    %cst_10 = arith.constant 0.000000e+00 : f32
    %24 = vector.broadcast %cst_10 : f32 to vector<8x256xf32>
    %25 = arith.maximumf %23, %24 : vector<8x256xf32>
    %26 = arith.truncf %25 : vector<8x256xf32> to vector<8x256xbf16>
    %c0_11 = arith.constant 0 : index
    %c0_12 = arith.constant 0 : index
    %27 = vector.load %arg6[%c0_11, %c0_12] : memref<256x3xbf16, #tpu.memory_space<vmem>>, vector<256x3xbf16>
    %cst_13 = arith.constant dense<0.000000e+00> : vector<8x3xf32>
    %28 = tpu.matmul %26, %27, %cst_13 {dimension_numbers = #tpu.dot_dimension_numbers<[1], [0], [0], [1], [0, 0, 1, 1], [], []>} : vector<8x256xbf16>, vector<256x3xbf16>, vector<8x3xf32> -> vector<8x3xf32>
    %c0_14 = arith.constant 0 : index
    %c0_15 = arith.constant 0 : index
    %29 = vector.load %arg7[%c0_14, %c0_15] : memref<1x3xf32, #tpu.memory_space<vmem>>, vector<1x3xf32>
    %30 = vector.broadcast %29 : vector<1x3xf32> to vector<8x3xf32>
    %31 = arith.addf %28, %30 : vector<8x3xf32>
    %32 = arith.negf %31 : vector<8x3xf32>
    %33 = math.exp %32 : vector<8x3xf32>
    %cst_16 = arith.constant 1.000000e+00 : f32
    %34 = vector.broadcast %cst_16 : f32 to vector<8x3xf32>
    %35 = arith.addf %34, %33 : vector<8x3xf32>
    %36 = arith.divf %34, %35 : vector<8x3xf32>
    %c0_17 = arith.constant 0 : index
    %c0_18 = arith.constant 0 : index
    %37 = vector.load %arg8[%c0_17, %c0_18] : memref<8x3xf32, #tpu.memory_space<vmem>>, vector<8x3xf32>
    tpu.vector_store %arg8[%c0_17, %c0_18], %36 {strides = array<i32>} : memref<8x3xf32, #tpu.memory_space<vmem>>, vector<8x3xf32>,
    return
  }
  func.func @transform_0(%arg0: i32) -> (i32, i32) {
    %c0_i32 = arith.constant 0 : i32
    %c0_i32_0 = arith.constant 0 : i32
    return %arg0, %c0_i32 : i32, i32
  }
  func.func @transform_1(%arg0: i32) -> (i32, i32) {
    %c0_i32 = arith.constant 0 : i32
    %c0_i32_0 = arith.constant 0 : i32
    %c0_i32_1 = arith.constant 0 : i32
    return %c0_i32, %c0_i32_0 : i32, i32
  }
  func.func @transform_2(%arg0: i32) -> (i32, i32) {
    %c0_i32 = arith.constant 0 : i32
    %c0_i32_0 = arith.constant 0 : i32
    %c0_i32_1 = arith.constant 0 : i32
    return %c0_i32, %c0_i32_0 : i32, i32
  }
  func.func @transform_3(%arg0: i32) -> (i32, i32) {
    %c0_i32 = arith.constant 0 : i32
    %c0_i32_0 = arith.constant 0 : i32
    %c0_i32_1 = arith.constant 0 : i32
    return %c0_i32, %c0_i32_0 : i32, i32
  }
  func.func @transform_4(%arg0: i32) -> (i32, i32) {
    %c0_i32 = arith.constant 0 : i32
    %c0_i32_0 = arith.constant 0 : i32
    %c0_i32_1 = arith.constant 0 : i32
    return %c0_i32, %c0_i32_0 : i32, i32
  }
  func.func @transform_5(%arg0: i32) -> (i32, i32) {
    %c0_i32 = arith.constant 0 : i32
    %c0_i32_0 = arith.constant 0 : i32
    %c0_i32_1 = arith.constant 0 : i32
    return %c0_i32, %c0_i32_0 : i32, i32
  }
  func.func @transform_6(%arg0: i32) -> (i32, i32) {
    %c0_i32 = arith.constant 0 : i32
    %c0_i32_0 = arith.constant 0 : i32
    %c0_i32_1 = arith.constant 0 : i32
    return %c0_i32, %c0_i32_0 : i32, i32
  }
  func.func @transform_7(%arg0: i32) -> (i32, i32) {
    %c0_i32 = arith.constant 0 : i32
    %c0_i32_0 = arith.constant 0 : i32
    return %arg0, %c0_i32 : i32, i32
  }
}

</mosaic_0001>

<llo_original>
// kernel: mlp_forward.1
$region0: #{mlp_forward.1}
  #allocation0 [shape = 'u32[]', space=smem, size = 0x4, offset = 0x4, fixed_abs, tag = 'smem constant byte address 0x4 - core index']
  #allocation1 [shape = 'u32[144,128]{1,0:T(1,128)}', space=vmem, size = 0x12000, scoped, tag = 'internal scratch']
  %s0 = inlined_call_operand.vmem [shape: f32[8,2], index: 0, kind: input, shape index: {}]
  %s1 = inlined_call_operand.vmem [shape: f32[2,256], index: 1, kind: input, shape index: {}]
  %s2 = inlined_call_operand.vmem [shape: f32[1,256], index: 2, kind: input, shape index: {}]
  %s3 = inlined_call_operand.hbm [shape: bf16[256,256], index: 3, kind: input, shape index: {}]
  %s4 = inlined_call_operand.vmem [shape: f32[1,256], index: 4, kind: input, shape index: {}]
  %s5 = inlined_call_operand.vmem [shape: bf16[256,3], index: 5, kind: input, shape index: {}]
  %s6 = inlined_call_operand.vmem [shape: f32[1,3], index: 6, kind: input, shape index: {}]
  %s7 = inlined_call_operand.vmem [shape: f32[8,3], index: 7, kind: output, shape index: {}]
  %s8 = sld [smem:[#allocation0]]
  $region42: #{mlp_forward.1} parent=0
    _
  %s10 = ssub.s32 1, %s8
  %s11 = scalar_select 0, %s10, %s8
  $region1: #{mlp_forward.1} parent=0
    #allocation2 [shape = 'u8[131072]{0}', space=vmem, size = 0x20000, scoped, tag = 'input window, operand 3, single buffered']
    #allocation3 [shape = 's32[1]{0}', space=sflag, size = 0x4, scoped, tag = 'scoped memory for mlp_forward.1']
    %12 = vsyncpa [#allocation3], 0
    // Predicated region
    $region2: #{mlp_forward.1} parent=1 // pred_check
      _
    $region3: #{mlp_forward.1} parent=1 // pred_check_branch
      %14 = sbr.rel (0) target = $region5
    $region4: #{mlp_forward.1} parent=1 // pred_region
      _
    $region5: #{mlp_forward.1} parent=1 // pred_fallthru
      _
    // Predicated region
    $region6: #{mlp_forward.1} parent=1 // pred_check
      _
    $region7: #{mlp_forward.1} parent=1 // pred_check_branch
      %16 = sbr.rel (0) target = $region9
    $region8: #{mlp_forward.1} parent=1 // pred_region
      _
    $region9: #{mlp_forward.1} parent=1 // pred_fallthru
      _
    // Predicated region
    $region10: #{mlp_forward.1} parent=1 // pred_check
      _
    $region11: #{mlp_forward.1} parent=1 // pred_check_branch
      %18 = sbr.rel (0) target = $region13
    $region12: #{mlp_forward.1} parent=1 // pred_region
      _
    $region13: #{mlp_forward.1} parent=1 // pred_fallthru
      _
    // Predicated region
    $region14: #{mlp_forward.1} parent=1 // pred_check
      _
    $region15: #{mlp_forward.1} parent=1 // pred_check_branch
      %20 = sbr.rel (0) target = $region17
    $region16: #{mlp_forward.1} parent=1 // pred_region
      %s22 = ssub.s32 4096, 4096
      %23 = vsyncadd [#allocation3], %s22
      %s24 = sshll.u32 [#allocation2], 4
      %s25 = int_to_ptr.vmem [resolvable:$true] %s24
      %30 = dma.hbm_to_vmem [thread:$0]  %s3, 4096, %s25, [#allocation3], 128, 128, 8
    $region17: #{mlp_forward.1} parent=1 // pred_fallthru
      _
    // Predicated region
    $region18: #{mlp_forward.1} parent=1 // pred_check
      _
    $region19: #{mlp_forward.1} parent=1 // pred_check_branch
      %32 = sbr.rel (0) target = $region21
    $region20: #{mlp_forward.1} parent=1 // pred_region
      _
    $region21: #{mlp_forward.1} parent=1 // pred_fallthru
      _
    // Predicated region
    $region22: #{mlp_forward.1} parent=1 // pred_check
      _
    $region23: #{mlp_forward.1} parent=1 // pred_check_branch
      %34 = sbr.rel (0) target = $region25
    $region24: #{mlp_forward.1} parent=1 // pred_region
      _
    $region25: #{mlp_forward.1} parent=1 // pred_fallthru
      _
    // Predicated region
    $region26: #{mlp_forward.1} parent=1 // pred_check
      _
    $region27: #{mlp_forward.1} parent=1 // pred_check_branch
      %36 = sbr.rel (0) target = $region29
    $region28: #{mlp_forward.1} parent=1 // pred_region
      _
    $region29: #{mlp_forward.1} parent=1 // pred_fallthru
      _
    // Predicated region
    $region30: #{mlp_forward.1} parent=1 // pred_check
      _
    $region31: #{mlp_forward.1} parent=1 // pred_check_branch
      %38 = sbr.rel (0) target = $region33
    $region32: #{mlp_forward.1} parent=1 // pred_region
      %39 = dma.done [#allocation3], 4096
    $region33: #{mlp_forward.1} parent=1 // pred_fallthru
      _
    %v41 = vld [vmem:[%s0] sm:$0xff]
    %v42 = vld [vmem:[%s1] sm:$0xf]
    %44 = vset.pattern.permute.xlu0 0
    %45 = vperm.xlu0 %44, %v41
    %v46 = vpop.permute.xlu0 %45
    %v49 = vlaneseq
    %v50 = vshrl.u32 %v49, 7
    %v51 = vsub.s32 0, %v50
    %v52 = vrot.slane %v42, %v51
    %v53 = vlaneseq
    %v54 = vshrl.u32 %v53, 7
    %v55 = vsub.s32 2, %v54
    %v56 = vrot.slane %v42, %v55
    %v59 = vlaneseq
    %v60 = vshrl.u32 %v59, 7
    %v61 = vsub.s32 0, %v60
    %v62 = vrot.slane %v52, %v61
    %v63 = vlaneseq
    %v64 = vshrl.u32 %v63, 7
    %v65 = vsub.s32 0, %v64
    %v66 = vrot.slane %v56, %v65
    %v67 = vmul.f32 %v46, %v62
    %v68 = vmul.f32 %v46, %v66
    %v69 = vld [vmem:[%s2] sm:$0x3]
    %v71 = vlaneseq
    %v72 = vshrl.u32 %v71, 7
    %v73 = vsub.s32 0, %v72
    %v74 = vrot.slane %v69, %v73
    %v75 = vlaneseq
    %v76 = vshrl.u32 %v75, 7
    %v77 = vsub.s32 1, %v76
    %v78 = vrot.slane %v69, %v77
    %v81 = vadd.f32 %v67, %v74
    %v82 = vadd.f32 %v68, %v78
    %83 = vset.pattern.permute.xlu0 1
    %84 = vperm.xlu0 %83, %v41
    %v85 = vpop.permute.xlu0 %84
    %v87 = vlaneseq
    %v88 = vshrl.u32 %v87, 7
    %v89 = vsub.s32 1, %v88
    %v90 = vrot.slane %v42, %v89
    %v91 = vlaneseq
    %v92 = vshrl.u32 %v91, 7
    %v93 = vsub.s32 3, %v92
    %v94 = vrot.slane %v42, %v93
    %v97 = vlaneseq
    %v98 = vshrl.u32 %v97, 7
    %v99 = vsub.s32 1, %v98
    %v100 = vrot.slane %v90, %v99
    %v101 = vlaneseq
    %v102 = vshrl.u32 %v101, 7
    %v103 = vsub.s32 1, %v102
    %v104 = vrot.slane %v94, %v103
    %v105 = vmul.f32 %v85, %v100
    %v106 = vmul.f32 %v85, %v104
    %v107 = vadd.f32 %v81, %v105
    %v108 = vadd.f32 %v82, %v106
    %v109 = vmax.f32 %v107, 0.0
    %v110 = vmax.f32 %v108, 0.0
    %v111 = vpack.c.bf16 %v109, %v109
    %v112 = vpack.c.bf16 %v110, %v110
    %v113 = vld [vmem:[#allocation2] sm:$0xff]
    %v114 = vld [vmem:[#allocation2 + $0x8] sm:$0xff]
    %v115 = vld [vmem:[#allocation2 + $0x10] sm:$0xff]
    %v116 = vld [vmem:[#allocation2 + $0x18] sm:$0xff]
    %v117 = vld [vmem:[#allocation2 + $0x20] sm:$0xff]
    %v118 = vld [vmem:[#allocation2 + $0x28] sm:$0xff]
    %v119 = vld [vmem:[#allocation2 + $0x30] sm:$0xff]
    %v120 = vld [vmem:[#allocation2 + $0x38] sm:$0xff]
    %v121 = vld [vmem:[#allocation2 + $0x40] sm:$0xff]
    %v122 = vld [vmem:[#allocation2 + $0x48] sm:$0xff]
    %v123 = vld [vmem:[#allocation2 + $0x50] sm:$0xff]
    %v124 = vld [vmem:[#allocation2 + $0x58] sm:$0xff]
    %v125 = vld [vmem:[#allocation2 + $0x60] sm:$0xff]
    %v126 = vld [vmem:[#allocation2 + $0x68] sm:$0xff]
    %v127 = vld [vmem:[#allocation2 + $0x70] sm:$0xff]
    %v128 = vld [vmem:[#allocation2 + $0x78] sm:$0xff]
    %v129 = vld [vmem:[#allocation2 + $0x80] sm:$0xff]
    %v130 = vld [vmem:[#allocation2 + $0x88] sm:$0xff]
    %v131 = vld [vmem:[#allocation2 + $0x90] sm:$0xff]
    %v132 = vld [vmem:[#allocation2 + $0x98] sm:$0xff]
    %v133 = vld [vmem:[#allocation2 + $0xa0] sm:$0xff]
    %v134 = vld [vmem:[#allocation2 + $0xa8] sm:$0xff]
    %v135 = vld [vmem:[#allocation2 + $0xb0] sm:$0xff]
    %v136 = vld [vmem:[#allocation2 + $0xb8] sm:$0xff]
    %v137 = vld [vmem:[#allocation2 + $0xc0] sm:$0xff]
    %v138 = vld [vmem:[#allocation2 + $0xc8] sm:$0xff]
    %v139 = vld [vmem:[#allocation2 + $0xd0] sm:$0xff]
    %v140 = vld [vmem:[#allocation2 + $0xd8] sm:$0xff]
    %v141 = vld [vmem:[#allocation2 + $0xe0] sm:$0xff]
    %v142 = vld [vmem:[#allocation2 + $0xe8] sm:$0xff]
    %v143 = vld [vmem:[#allocation2 + $0xf0] sm:$0xff]
    %v144 = vld [vmem:[#allocation2 + $0xf8] sm:$0xff]
    %v145 = vld [vmem:[%s4] sm:$0x3]
    %v147 = vlaneseq
    %v148 = vshrl.u32 %v147, 7
    %v149 = vsub.s32 0, %v148
    %v150 = vrot.slane %v145, %v149
    %v151 = vlaneseq
    %v152 = vshrl.u32 %v151, 7
    %v153 = vsub.s32 1, %v152
    %v154 = vrot.slane %v145, %v153
    %v189 = vunpack.c.l.b16 %v113
    %v190 = vunpack.c.h.b16 %v113
    %v191 = vunpack.c.l.b16 %v114
    %v192 = vunpack.c.h.b16 %v114
    %v193 = vunpack.c.l.b16 %v115
    %v194 = vunpack.c.h.b16 %v115
    %v195 = vunpack.c.l.b16 %v116
    %v196 = vunpack.c.h.b16 %v116
    %v197 = vunpack.c.l.b16 %v117
    %v198 = vunpack.c.h.b16 %v117
    %v199 = vunpack.c.l.b16 %v118
    %v200 = vunpack.c.h.b16 %v118
    %v201 = vunpack.c.l.b16 %v119
    %v202 = vunpack.c.h.b16 %v119
    %v203 = vunpack.c.l.b16 %v120
    %v204 = vunpack.c.h.b16 %v120
    %v205 = vunpack.c.l.b16 %v121
    %v206 = vunpack.c.h.b16 %v121
    %v207 = vunpack.c.l.b16 %v122
    %v208 = vunpack.c.h.b16 %v122
    %v209 = vunpack.c.l.b16 %v123
    %v210 = vunpack.c.h.b16 %v123
    %v211 = vunpack.c.l.b16 %v124
    %v212 = vunpack.c.h.b16 %v124
    %v213 = vunpack.c.l.b16 %v125
    %v214 = vunpack.c.h.b16 %v125
    %v215 = vunpack.c.l.b16 %v126
    %v216 = vunpack.c.h.b16 %v126
    %v217 = vunpack.c.l.b16 %v127
    %v218 = vunpack.c.h.b16 %v127
    %v219 = vunpack.c.l.b16 %v128
    %v220 = vunpack.c.h.b16 %v128
    %v221 = vunpack.c.l.b16 %v129
    %v222 = vunpack.c.h.b16 %v129
    %v223 = vunpack.c.l.b16 %v130
    %v224 = vunpack.c.h.b16 %v130
    %v225 = vunpack.c.l.b16 %v131
    %v226 = vunpack.c.h.b16 %v131
    %v227 = vunpack.c.l.b16 %v132
    %v228 = vunpack.c.h.b16 %v132
    %v229 = vunpack.c.l.b16 %v133
    %v230 = vunpack.c.h.b16 %v133
    %v231 = vunpack.c.l.b16 %v134
    %v232 = vunpack.c.h.b16 %v134
    %v233 = vunpack.c.l.b16 %v135
    %v234 = vunpack.c.h.b16 %v135
    %v235 = vunpack.c.l.b16 %v136
    %v236 = vunpack.c.h.b16 %v136
    %v237 = vunpack.c.l.b16 %v137
    %v238 = vunpack.c.h.b16 %v137
    %v239 = vunpack.c.l.b16 %v138
    %v240 = vunpack.c.h.b16 %v138
    %v241 = vunpack.c.l.b16 %v139
    %v242 = vunpack.c.h.b16 %v139
    %v243 = vunpack.c.l.b16 %v140
    %v244 = vunpack.c.h.b16 %v140
    %v245 = vunpack.c.l.b16 %v141
    %v246 = vunpack.c.h.b16 %v141
    %v247 = vunpack.c.l.b16 %v142
    %v248 = vunpack.c.h.b16 %v142
    %v249 = vunpack.c.l.b16 %v143
    %v250 = vunpack.c.h.b16 %v143
    %v251 = vunpack.c.l.b16 %v144
    %v252 = vunpack.c.h.b16 %v144
    %v253 = vpack.c.b16 %v191, %v189
    %v254 = vpack.c.b16 %v192, %v190
    %v255 = vpack.c.b16 %v195, %v193
    %v256 = vpack.c.b16 %v196, %v194
    %v257 = vpack.c.b16 %v199, %v197
    %v258 = vpack.c.b16 %v200, %v198
    %v259 = vpack.c.b16 %v203, %v201
    %v260 = vpack.c.b16 %v204, %v202
    %v261 = vpack.c.b16 %v207, %v205
    %v262 = vpack.c.b16 %v208, %v206
    %v263 = vpack.c.b16 %v211, %v209
    %v264 = vpack.c.b16 %v212, %v210
    %v265 = vpack.c.b16 %v215, %v213
    %v266 = vpack.c.b16 %v216, %v214
    %v267 = vpack.c.b16 %v219, %v217
    %v268 = vpack.c.b16 %v220, %v218
    %v269 = vpack.c.b16 %v223, %v221
    %v270 = vpack.c.b16 %v224, %v222
    %v271 = vpack.c.b16 %v227, %v225
    %v272 = vpack.c.b16 %v228, %v226
    %v273 = vpack.c.b16 %v231, %v229
    %v274 = vpack.c.b16 %v232, %v230
    %v275 = vpack.c.b16 %v235, %v233
    %v276 = vpack.c.b16 %v236, %v234
    %v277 = vpack.c.b16 %v239, %v237
    %v278 = vpack.c.b16 %v240, %v238
    %v279 = vpack.c.b16 %v243, %v241
    %v280 = vpack.c.b16 %v244, %v242
    %v281 = vpack.c.b16 %v247, %v245
    %v282 = vpack.c.b16 %v248, %v246
    %v283 = vpack.c.b16 %v251, %v249
    %v284 = vpack.c.b16 %v252, %v250
    %317 = vmatprep.subr.bf16.mxu0 %v254
    %318 = vmatpush1.bf16.msra.mxu0 %v253
    %319 = vmatprep.subr.bf16.mxu0 %v256
    %320 = vmatpush1.bf16.msra.mxu0 %v255
    %321 = vmatprep.subr.bf16.mxu0 %v258
    %322 = vmatpush1.bf16.msra.mxu0 %v257
    %323 = vmatprep.subr.bf16.mxu0 %v260
    %324 = vmatpush1.bf16.msra.mxu0 %v259
    %325 = vmatprep.subr.bf16.mxu0 %v262
    %326 = vmatpush1.bf16.msra.mxu0 %v261
    %327 = vmatprep.subr.bf16.mxu0 %v264
    %328 = vmatpush1.bf16.msra.mxu0 %v263
    %329 = vmatprep.subr.bf16.mxu0 %v266
    %330 = vmatpush1.bf16.msra.mxu0 %v265
    %331 = vmatprep.subr.bf16.mxu0 %v268
    %332 = vmatpush1.bf16.msra.mxu0 %v267
    %333 = vmatprep.subr.bf16.mxu0 %v270
    %334 = vmatpush1.bf16.msra.mxu0 %v269
    %335 = vmatprep.subr.bf16.mxu0 %v272
    %336 = vmatpush1.bf16.msra.mxu0 %v271
    %337 = vmatprep.subr.bf16.mxu0 %v274
    %338 = vmatpush1.bf16.msra.mxu0 %v273
    %339 = vmatprep.subr.bf16.mxu0 %v276
    %340 = vmatpush1.bf16.msra.mxu0 %v275
    %341 = vmatprep.subr.bf16.mxu0 %v278
    %342 = vmatpush1.bf16.msra.mxu0 %v277
    %343 = vmatprep.subr.bf16.mxu0 %v280
    %344 = vmatpush1.bf16.msra.mxu0 %v279
    %345 = vmatprep.subr.bf16.mxu0 %v282
    %346 = vmatpush1.bf16.msra.mxu0 %v281
    %347 = vmatprep.subr.bf16.mxu0 %v284
    %348 = vmatpush1.bf16.msra.mxu0 %v283
    %349 = vmatprep.mubr.bf16.mxu0 %v112
    %350 = vmatmul.mubr.bf16.gmra.mrb[0].mxu0 %v111
    %v351 = vpop.f32.mrb[0].mxu0
    %v352 = vadd.f32 %v150, %v351
    %v353 = vpop.f32.mrb[0].mxu0
    %v354 = vadd.f32 %v154, %v353
    %v355 = vpop.f32.mrb[0].mxu0
    %v356 = vpop.f32.mrb[0].mxu0
    %357 = vdwg.mxu0
    %v358 = vmax.f32 %v352, 0.0
    %v359 = vmax.f32 %v354, 0.0
    %v360 = vpack.c.bf16 %v358, %v358
    %v361 = vpack.c.bf16 %v359, %v359
    %v362 = vld [vmem:[%s5] sm:$0xf]
    %v363 = vld [vmem:[%s5 + $0x4] sm:$0xf]
    %v364 = vld [vmem:[%s5 + $0x8] sm:$0xf]
    %v365 = vld [vmem:[%s5 + $0xc] sm:$0xf]
    %v366 = vld [vmem:[%s5 + $0x10] sm:$0xf]
    %v367 = vld [vmem:[%s5 + $0x14] sm:$0xf]
    %v368 = vld [vmem:[%s5 + $0x18] sm:$0xf]
    %v369 = vld [vmem:[%s5 + $0x1c] sm:$0xf]
    %v370 = vld [vmem:[%s5 + $0x20] sm:$0xf]
    %v371 = vld [vmem:[%s5 + $0x24] sm:$0xf]
    %v372 = vld [vmem:[%s5 + $0x28] sm:$0xf]
    %v373 = vld [vmem:[%s5 + $0x2c] sm:$0xf]
    %v374 = vld [vmem:[%s5 + $0x30] sm:$0xf]
    %v375 = vld [vmem:[%s5 + $0x34] sm:$0xf]
    %v376 = vld [vmem:[%s5 + $0x38] sm:$0xf]
    %v377 = vld [vmem:[%s5 + $0x3c] sm:$0xf]
    %v378 = vld [vmem:[%s5 + $0x40] sm:$0xf]
    %v379 = vld [vmem:[%s5 + $0x44] sm:$0xf]
    %v380 = vld [vmem:[%s5 + $0x48] sm:$0xf]
    %v381 = vld [vmem:[%s5 + $0x4c] sm:$0xf]
    %v382 = vld [vmem:[%s5 + $0x50] sm:$0xf]
    %v383 = vld [vmem:[%s5 + $0x54] sm:$0xf]
    %v384 = vld [vmem:[%s5 + $0x58] sm:$0xf]
    %v385 = vld [vmem:[%s5 + $0x5c] sm:$0xf]
    %v386 = vld [vmem:[%s5 + $0x60] sm:$0xf]
    %v387 = vld [vmem:[%s5 + $0x64] sm:$0xf]
    %v388 = vld [vmem:[%s5 + $0x68] sm:$0xf]
    %v389 = vld [vmem:[%s5 + $0x6c] sm:$0xf]
    %v390 = vld [vmem:[%s5 + $0x70] sm:$0xf]
    %v391 = vld [vmem:[%s5 + $0x74] sm:$0xf]
    %v392 = vld [vmem:[%s5 + $0x78] sm:$0xf]
    %v393 = vld [vmem:[%s5 + $0x7c] sm:$0xf]
    %v394 = vld [vmem:[%s6] sm:$0x1]
    %v396 = vlaneseq
    %v397 = vshrl.u32 %v396, 7
    %v398 = vsub.s32 0, %v397
    %v399 = vrot.slane %v394, %v398
    %v433 = vunpack.c.l.b16 %v362
    %v434 = vunpack.c.l.b16 %v363
    %v435 = vunpack.c.l.b16 %v364
    %v436 = vunpack.c.l.b16 %v365
    %v437 = vunpack.c.l.b16 %v366
    %v438 = vunpack.c.l.b16 %v367
    %v439 = vunpack.c.l.b16 %v368
    %v440 = vunpack.c.l.b16 %v369
    %v441 = vunpack.c.l.b16 %v370
    %v442 = vunpack.c.l.b16 %v371
    %v443 = vunpack.c.l.b16 %v372
    %v444 = vunpack.c.l.b16 %v373
    %v445 = vunpack.c.l.b16 %v374
    %v446 = vunpack.c.l.b16 %v375
    %v447 = vunpack.c.l.b16 %v376
    %v448 = vunpack.c.l.b16 %v377
    %v449 = vunpack.c.l.b16 %v378
    %v450 = vunpack.c.l.b16 %v379
    %v451 = vunpack.c.l.b16 %v380
    %v452 = vunpack.c.l.b16 %v381
    %v453 = vunpack.c.l.b16 %v382
    %v454 = vunpack.c.l.b16 %v383
    %v455 = vunpack.c.l.b16 %v384
    %v456 = vunpack.c.l.b16 %v385
    %v457 = vunpack.c.l.b16 %v386
    %v458 = vunpack.c.l.b16 %v387
    %v459 = vunpack.c.l.b16 %v388
    %v460 = vunpack.c.l.b16 %v389
    %v461 = vunpack.c.l.b16 %v390
    %v462 = vunpack.c.l.b16 %v391
    %v463 = vunpack.c.l.b16 %v392
    %v464 = vunpack.c.l.b16 %v393
    %v465 = vpack.c.b16 %v434, %v433
    %v466 = vpack.c.b16 %v436, %v435
    %v467 = vpack.c.b16 %v438, %v437
    %v468 = vpack.c.b16 %v440, %v439
    %v469 = vpack.c.b16 %v442, %v441
    %v470 = vpack.c.b16 %v444, %v443
    %v471 = vpack.c.b16 %v446, %v445
    %v472 = vpack.c.b16 %v448, %v447
    %v473 = vpack.c.b16 %v450, %v449
    %v474 = vpack.c.b16 %v452, %v451
    %v475 = vpack.c.b16 %v454, %v453
    %v476 = vpack.c.b16 %v456, %v455
    %v477 = vpack.c.b16 %v458, %v457
    %v478 = vpack.c.b16 %v460, %v459
    %v479 = vpack.c.b16 %v462, %v461
    %v480 = vpack.c.b16 %v464, %v463
    %497 = vmatprep.subr.bf16.mxu0 0
    %498 = vmatpush1.bf16.msra.mxu0 %v465
    %499 = vmatprep.subr.bf16.mxu0 0
    %500 = vmatpush1.bf16.msra.mxu0 %v466
    %501 = vmatprep.subr.bf16.mxu0 0
    %502 = vmatpush1.bf16.msra.mxu0 %v467
    %503 = vmatprep.subr.bf16.mxu0 0
    %504 = vmatpush1.bf16.msra.mxu0 %v468
    %505 = vmatprep.subr.bf16.mxu0 0
    %506 = vmatpush1.bf16.msra.mxu0 %v469
    %507 = vmatprep.subr.bf16.mxu0 0
    %508 = vmatpush1.bf16.msra.mxu0 %v470
    %509 = vmatprep.subr.bf16.mxu0 0
    %510 = vmatpush1.bf16.msra.mxu0 %v471
    %511 = vmatprep.subr.bf16.mxu0 0
    %512 = vmatpush1.bf16.msra.mxu0 %v472
    %513 = vmatprep.subr.bf16.mxu0 0
    %514 = vmatpush1.bf16.msra.mxu0 %v473
    %515 = vmatprep.subr.bf16.mxu0 0
    %516 = vmatpush1.bf16.msra.mxu0 %v474
    %517 = vmatprep.subr.bf16.mxu0 0
    %518 = vmatpush1.bf16.msra.mxu0 %v475
    %519 = vmatprep.subr.bf16.mxu0 0
    %520 = vmatpush1.bf16.msra.mxu0 %v476
    %521 = vmatprep.subr.bf16.mxu0 0
    %522 = vmatpush1.bf16.msra.mxu0 %v477
    %523 = vmatprep.subr.bf16.mxu0 0
    %524 = vmatpush1.bf16.msra.mxu0 %v478
    %525 = vmatprep.subr.bf16.mxu0 0
    %526 = vmatpush1.bf16.msra.mxu0 %v479
    %527 = vmatprep.subr.bf16.mxu0 0
    %528 = vmatpush1.bf16.msra.mxu0 %v480
    %529 = vmatprep.mubr.bf16.mxu0 %v361
    %530 = vmatmul.mubr.bf16.gmra.mrb[0].mxu0 %v360
    %v531 = vpop.f32.mrb[0].mxu0
    %v532 = vadd.f32 %v399, %v531
    %v533 = vpop.f32.mrb[0].mxu0
    %v534 = vpop.f32.mrb[0].mxu0
    %v535 = vpop.f32.mrb[0].mxu0
    %536 = vdwg.mxu0
    %v537 = vxor.u32 %v532, 2147483648
    %v538 = vmul.f32 %v537, 1.442695
    %v539 = vpow.pop %v538
    %v540 = vadd.f32 %v539, 1.0
    %v541 = vrcp.pop %v540
    %v542 = vmul.f32 1.0, %v541
    %vm543 = vcmask 23552
    %544 = vst.msk [vmem:[%s7] sm:$0xff] %vm543, %v542
    // Predicated region
    $region34: #{mlp_forward.1} parent=1 // pred_check
      _
    $region35: #{mlp_forward.1} parent=1 // pred_check_branch
      %546 = sbr.rel (0) target = $region37
    $region36: #{mlp_forward.1} parent=1 // pred_region
      _
    $region37: #{mlp_forward.1} parent=1 // pred_fallthru
      _
    // Predicated region
    $region38: #{mlp_forward.1} parent=1 // pred_check
      _
    $region39: #{mlp_forward.1} parent=1 // pred_check_branch
      %548 = sbr.rel (0) target = $region41
    $region40: #{mlp_forward.1} parent=1 // pred_region
      _
    $region41: #{mlp_forward.1} parent=1 // pred_fallthru
      _
    %549 = vsyncpa [#allocation3], 1

</llo_original>
